<compile_context>
chip_gen: v5e
topology: v5e:2x2
jax: 0.10.0
libtpu: 0.0.40
codegen_flags: <defaults>
</compile_context>

<pallas_src>
import functools

import jax
import jax.numpy as jnp
from jax.experimental import pallas as pl
from jax.experimental.pallas import tpu as pltpu

LANES = 128                      # vreg lane width — last dim stays lane-dense
DEFAULT_SHIFT = 0.1              # ModifiedSigmoid(shift=0.1)
DEFAULT_BLOCK_BYTES = 2 * 1024 * 1024   # ~2 MiB per block (4 live bufs ~ 8 MiB)


def _round_up(a, b):
    return ((a + b - 1) // b) * b


def _sublane_min(itemsize):
    # Minimum second-to-last block dim: 8 (f32), 16 (bf16/f16), 32 (int8/fp8).
    return max(8, 32 // max(1, itemsize))


def _bf16_eup_supported():
    # v2–v5 have no bf16 VPU/EUP; v6e and later do.
    try:
        kind = jax.devices()[0].device_kind.lower()
    except Exception:
        return False
    return not any(t in kind for t in ("v2", "v3", "v4", "v5"))


def modified_sigmoid_kernel(x_ref, o_ref, *, shift, compute_dtype):
    """sigmoid(x) - shift on one (tile_rows, 128) tile, via the tanh identity."""
    x = x_ref[...].astype(compute_dtype)
    half = jnp.asarray(0.5, compute_dtype)
    bias = jnp.asarray(0.5 - shift, compute_dtype)
    # sigmoid(x) - shift == 0.5 * tanh(0.5 * x) + (0.5 - shift)
    y = half * jnp.tanh(x * half) + bias
    o_ref[...] = y.astype(o_ref.dtype)


def modified_sigmoid_pallas(x, *, shift=DEFAULT_SHIFT,
                            block_bytes=DEFAULT_BLOCK_BYTES):
    """Apply sigmoid(x) - shift elementwise to an arbitrarily-shaped array."""
    orig_shape = x.shape
    dtype = x.dtype
    n = x.size
    if n == 0:                       # empty input: nothing to compute
        return x

    itemsize = jnp.dtype(dtype).itemsize
    min_rows = _sublane_min(itemsize)

    n_rows = pl.cdiv(n, LANES)       # rows of 128 lanes covering the input
    padded_n = n_rows * LANES

    # Tile size from a byte budget, rounded to the dtype's sublane minimum.
    tile_rows = max(min_rows,
                    (block_bytes // (LANES * itemsize)) // min_rows * min_rows)
    if n_rows > min_rows:
        # Keep >= 2 grid steps so the parallel axis can shard across both
        # TensorCores on v7x (no-op on single-TC v5e/v6e).
        tile_rows = min(tile_rows, _round_up(pl.cdiv(n_rows, 2), min_rows))
    else:
        tile_rows = min_rows

    num_blocks = pl.cdiv(n_rows, tile_rows)   # partial last block is masked

    # bf16 compute only where the EUP supports it; otherwise compute in f32.
    if dtype == jnp.bfloat16 and _bf16_eup_supported():
        compute_dtype = jnp.bfloat16
    else:
        compute_dtype = jnp.float32

    call = pl.pallas_call(
        functools.partial(modified_sigmoid_kernel, shift=shift,
                          compute_dtype=compute_dtype),
        out_shape=jax.ShapeDtypeStruct((n_rows, LANES), dtype),
        grid_spec=pltpu.PrefetchScalarGridSpec(
            num_scalar_prefetch=0,
            grid=(num_blocks,),
            in_specs=[pl.BlockSpec((tile_rows, LANES), lambda i: (i, 0))],
            out_specs=pl.BlockSpec((tile_rows, LANES), lambda i: (i, 0)),
        ),
        compiler_params=pltpu.CompilerParams(
            dimension_semantics=("parallel",)),
        cost_estimate=pl.CostEstimate(
            flops=3 * n, transcendentals=n,
            bytes_accessed=2 * n * itemsize),
    )

    if n == padded_n:
        # Fast path: lane-aligned element count -> free reshape, no pad/slice.
        out2d = call(jnp.reshape(x, (n_rows, LANES)))
        return out2d.reshape(orig_shape)

    # Ragged path: pad only to the next multiple of 128 (<= 127 elements).
    x_flat = jnp.pad(jnp.ravel(x), (0, padded_n - n))
    out2d = call(x_flat.reshape(n_rows, LANES))
    return out2d.reshape(-1)[:n].reshape(orig_shape)


def modified_sigmoid_ref(x, shift=DEFAULT_SHIFT):
    """Pure-JAX reference matching the PyTorch forward."""
    return jax.nn.sigmoid(x) - shift


if __name__ == "__main__":
    key = jax.random.PRNGKey(0)
    x = jax.random.normal(key, (2, 4, 16, 16), jnp.float32)

    out = modified_sigmoid_pallas(x)
    out = jax.block_until_ready(out)

    ref = modified_sigmoid_ref(x)
    assert out.shape == x.shape and out.dtype == x.dtype
    assert jnp.allclose(out, ref, atol=1e-5, rtol=1e-5), (
        float(jnp.max(jnp.abs(out - ref))))

    # Also exercise the ragged (non-128-multiple) path once.
    x2 = jax.random.normal(jax.random.PRNGKey(1), (3, 7, 11), jnp.float32)
    out2 = jax.block_until_ready(modified_sigmoid_pallas(x2))
    assert jnp.allclose(out2, modified_sigmoid_ref(x2), atol=1e-5, rtol=1e-5)

    print("KERNEL_OK")
</pallas_src>

<mosaic_0001>
module attributes {stable_mosaic.version = 11 : i64} {
  func.func @modified_sigmoid_kernel(%arg0: i32, %arg1: memref<8x128xf32, #tpu.memory_space<vmem>>, %arg2: memref<8x128xf32, #tpu.memory_space<vmem>>) attributes {dimension_semantics = [#tpu.dimension_semantics<parallel>], iteration_bounds = array<i64: 2>, scalar_prefetch = 0 : i64, scratch_operands = 0 : i64, tpu.core_type = #tpu.core_type<tc>, window_params = [{transform_indices = @transform_0, window_bounds = array<i64: 8, 128>}, {transform_indices = @transform_1, window_bounds = array<i64: 8, 128>}]} {
    %c0 = arith.constant 0 : index
    %c0_0 = arith.constant 0 : index
    %0 = vector.load %arg1[%c0, %c0_0] : memref<8x128xf32, #tpu.memory_space<vmem>>, vector<8x128xf32>
    %cst = arith.constant 5.000000e-01 : f32
    %1 = vector.broadcast %cst : f32 to vector<8x128xf32>
    %2 = arith.mulf %0, %1 : vector<8x128xf32>
    %3 = math.tanh %2 : vector<8x128xf32>
    %cst_1 = arith.constant 5.000000e-01 : f32
    %4 = vector.broadcast %cst_1 : f32 to vector<8x128xf32>
    %5 = arith.mulf %4, %3 : vector<8x128xf32>
    %cst_2 = arith.constant 4.000000e-01 : f32
    %6 = vector.broadcast %cst_2 : f32 to vector<8x128xf32>
    %7 = arith.addf %5, %6 : vector<8x128xf32>
    %c0_3 = arith.constant 0 : index
    %c0_4 = arith.constant 0 : index
    %8 = vector.load %arg2[%c0_3, %c0_4] : memref<8x128xf32, #tpu.memory_space<vmem>>, vector<8x128xf32>
    tpu.vector_store %arg2[%c0_3, %c0_4], %7 {strides = array<i32>} : memref<8x128xf32, #tpu.memory_space<vmem>>, vector<8x128xf32>,
    return
  }
  func.func @transform_0(%arg0: i32) -> (i32, i32) {
    %c0_i32 = arith.constant 0 : i32
    %c0_i32_0 = arith.constant 0 : i32
    return %arg0, %c0_i32 : i32, i32
  }
  func.func @transform_1(%arg0: i32) -> (i32, i32) {
    %c0_i32 = arith.constant 0 : i32
    %c0_i32_0 = arith.constant 0 : i32
    return %arg0, %c0_i32 : i32, i32
  }
}

</mosaic_0001>

<llo_original>
// kernel: tpu_custom_call.1
$region0: #{tpu_custom_call.1}
  #allocation0 [shape = 'u32[]', space=smem, size = 0x4, offset = 0x4, fixed_abs, tag = 'smem constant byte address 0x4 - core index']
  #allocation1 [shape = 'u32[72,128]{1,0:T(1,128)}', space=vmem, size = 0x9000, scoped, tag = 'internal scratch']
  %s0 = inlined_call_operand.hbm [shape: f32[16,128], index: 0, kind: input, shape index: {}]
  %s1 = inlined_call_operand.hbm [shape: f32[16,128], index: 1, kind: output, shape index: {}]
  %s2 = sld [smem:[#allocation0]]
  $region41: #{tpu_custom_call.1} parent=0
    _
  %s4 = ssub.s32 1, %s2
  %s5 = scalar_select 0, %s4, %s2
  $region1: #{tpu_custom_call.1} parent=0
    #allocation2 [shape = 'u8[8192]{0}', space=vmem, size = 0x2000, scoped, tag = 'input window, operand 0']
    #allocation3 [shape = 's32[2]{0}', space=sflag, size = 0x8, scoped, tag = 'scoped memory for tpu_custom_call.1']
    #allocation4 [shape = 's32[2]{0}', space=sflag, size = 0x8, scoped, tag = 'scoped memory for tpu_custom_call.1']
    #allocation5 [shape = 'u8[8192]{0}', space=vmem, size = 0x2000, scoped, tag = 'output window, operand 0']
    %6 = vsyncpa [#allocation3], 0
    %s7 = scalar_lea.sflag [#allocation3], 1
    %8 = vsyncpa %s7, 0
    %9 = vsyncpa [#allocation4], 0
    %s10 = scalar_lea.sflag [#allocation4], 1
    %11 = vsyncpa %s10, 0
    loop: start=0, step=1, limit=4
    $region2: #{tpu_custom_call.1} parent=1 // loop_pre_header
      _
    $region3: #{tpu_custom_call.1} parent=1 // loop_header
      %s13 = sphi 0, %s17
      %p14 = scmp.ge.s32.totalorder %s13, 4
      %s23 = sphi 0, %s25
      %s26 = sphi 0, %s23
      %s27 = sphi 0, %s26
      %s43 = sphi 0, %s27
      %s49 = sphi 0, %s51
      %s52 = sphi 0, %s49
      %s53 = sphi 0, %s52
      %s69 = sphi 0, %s53
    $region4: #{tpu_custom_call.1} parent=1 // loop_header_branch
      %16 = sbr.rel (%p14) target = $region8
    $region5: #{tpu_custom_call.1} parent=1 // loop_body
      %s18 = ssub.s32 %s13, 1
      %s19 = ssub.s32 %s13, 2
      %s20 = sadd.s32 %s13, 1
      %s21 = ssub.s32 %s13, %s20
      %p22 = scmp.eq.s32.totalorder %s21, 0
      %s24 = sadd.s32 %s23, 1
      %s25 = scalar_select %p22, %s23, %s24
      %p28 = pneg %p22
      %p29 = scmp.eq.s32.totalorder %s13, 1
      %p30 = por %p28, %p29
      %p31 = scmp.ne.s32.totalorder %s23, %s26
      %p32 = scmp.eq.s32.totalorder %s13, 0
      %p33 = por %p31, %p32
      %p34 = scmp.ne.s32.totalorder %s23, %s26
      %p35 = scmp.eq.s32.totalorder %s18, 1
      %p36 = por %p34, %p35
      %p37 = scmp.ne.s32.totalorder %s26, %s27
      %p38 = scmp.eq.s32.totalorder %s18, 0
      %p39 = por %p37, %p38
      %p40 = scmp.ne.s32.totalorder %s26, %s27
      %p41 = scmp.eq.s32.totalorder %s19, 1
      %p42 = por %p40, %p41
      %p44 = scmp.ne.s32.totalorder %s27, %s43
      %p45 = scmp.eq.s32.totalorder %s19, 0
      %p46 = por %p44, %p45
      %s47 = ssub.s32 %s13, %s20
      %p48 = scmp.eq.s32.totalorder %s47, 0
      %s50 = sadd.s32 %s49, 1
      %s51 = scalar_select %p48, %s49, %s50
      %p54 = pneg %p48
      %p55 = scmp.eq.s32.totalorder %s13, 1
      %p56 = por %p54, %p55
      %p57 = scmp.ne.s32.totalorder %s49, %s52
      %p58 = scmp.eq.s32.totalorder %s13, 0
      %p59 = por %p57, %p58
      %p60 = scmp.ne.s32.totalorder %s49, %s52
      %p61 = scmp.eq.s32.totalorder %s18, 1
      %p62 = por %p60, %p61
      %p63 = scmp.ne.s32.totalorder %s52, %s53
      %p64 = scmp.eq.s32.totalorder %s18, 0
      %p65 = por %p63, %p64
      %p66 = scmp.ne.s32.totalorder %s52, %s53
      %p67 = scmp.eq.s32.totalorder %s19, 1
      %p68 = por %p66, %p67
      %p70 = scmp.ne.s32.totalorder %s53, %s69
      %p71 = scmp.eq.s32.totalorder %s19, 0
      %p72 = por %p70, %p71
      %p73 = scmp.le.s32.totalorder 1, %s13
      %p74 = scmp.lt.s32.totalorder %s13, 3
      %p75 = pnand %p73, %p74
      %p76 = pneg %p75
      // Predicated region
      $region9: #{tpu_custom_call.1} parent=5 // pred_check
        _
      $region10: #{tpu_custom_call.1} parent=5 // pred_check_branch
        %78 = sbr.rel (%p75) target = $region12
      $region11: #{tpu_custom_call.1} parent=5 // pred_region
        %s79 = ssub.s32 %s13, 1
      $region12: #{tpu_custom_call.1} parent=5 // pred_fallthru
        _
      %p80 = scmp.lt.s32.totalorder %s13, 2
      // Predicated region
      $region13: #{tpu_custom_call.1} parent=5 // pred_check
        %p81 = pneg %p80
      $region14: #{tpu_custom_call.1} parent=5 // pred_check_branch
        %83 = sbr.rel (%p81) target = $region16
      $region15: #{tpu_custom_call.1} parent=5 // pred_region
        // Predicated region
        $region17: #{tpu_custom_call.1} parent=15 // pred_check
          %p84 = pneg %p33
        $region18: #{tpu_custom_call.1} parent=15 // pred_check_branch
          %86 = sbr.rel (%p84) target = $region20
        $region19: #{tpu_custom_call.1} parent=15 // pred_region
          %s87 = sand.u32 %s23, 1
          %s88 = scalar_lea.sflag [#allocation3], %s87
          %s89 = sand.u32 %s23, 1
          %s90 = smul.addr %s89, 8
          %s91 = scalar_lea.vmem [#allocation2], %s90
          %93 = vsyncadd %s88, 0
          %s94 = smul.addr %s13, 8
          %s95 = scalar_lea.hbm %s0, %s94
          %s97 = sshll.u32 %s95, 4
          %s98 = int_to_ptr.hbm [resolvable:$true] %s97
          %s99 = sshll.u32 %s91, 4
          %s100 = int_to_ptr.vmem [resolvable:$true] %s99
          %102 = dma.hbm_to_vmem [thread:$0]  %s98, 128, %s100, %s88
        $region20: #{tpu_custom_call.1} parent=15 // pred_fallthru
          _
      $region16: #{tpu_custom_call.1} parent=5 // pred_fallthru
        _
      %p103 = scmp.le.s32.totalorder 1, %s13
      %p104 = scmp.lt.s32.totalorder %s13, 3
      %p105 = pnand %p103, %p104
      %p106 = pneg %p105
      // Predicated region
      $region21: #{tpu_custom_call.1} parent=5 // pred_check
        _
      $region22: #{tpu_custom_call.1} parent=5 // pred_check_branch
        %108 = sbr.rel (%p105) target = $region24
      $region23: #{tpu_custom_call.1} parent=5 // pred_region
        %s109 = ssub.s32 %s13, 1
        %s110 = sand.u32 %s26, 1
        %s111 = scalar_lea.sflag [#allocation3], %s110
        %s112 = sand.u32 %s26, 1
        %s113 = smul.addr %s112, 8
        %s114 = scalar_lea.vmem [#allocation2], %s113
        // Predicated region
        $region25: #{tpu_custom_call.1} parent=23 // pred_check
          %p115 = pneg %p39
        $region26: #{tpu_custom_call.1} parent=23 // pred_check_branch
          %117 = sbr.rel (%p115) target = $region28
        $region27: #{tpu_custom_call.1} parent=23 // pred_region
          %119 = dma.done %s111, 128
        $region28: #{tpu_custom_call.1} parent=23 // pred_fallthru
          _
        %s120 = sand.u32 %s26, 1
        %s121 = scalar_lea.sflag [#allocation3], %s120
        %s122 = sand.u32 %s26, 1
        %s123 = smul.addr %s122, 8
        %s124 = scalar_lea.vmem [#allocation2], %s123
        %p125 = pneg %p39
        %p126 = pneg %p36
        %p127 = pneg %p65
        %p128 = pneg %p62
        %s129 = sand.u32 %s52, 1
        %s130 = scalar_lea.sflag [#allocation4], %s129
        %s131 = sand.u32 %s52, 1
        %s132 = smul.addr %s131, 8
        %s133 = scalar_lea.vmem [#allocation5], %s132
        %v134 = vld [vmem:[%s114] sm:$0xff]
        %v135 = vmul.f32 %v134, 0.5
        %v136 = vtanh.pop %v135
        %v137 = vmul.f32 %v136, 0.5
        %v138 = vadd.f32 %v137, 0.4
        %139 = vst [vmem:[%s133] sm:$0xff] %v138
        %s140 = sand.u32 %s52, 1
        %s141 = scalar_lea.sflag [#allocation4], %s140
        %s142 = sand.u32 %s52, 1
        %s143 = smul.addr %s142, 8
        %s144 = scalar_lea.vmem [#allocation5], %s143
        // Predicated region
        $region29: #{tpu_custom_call.1} parent=23 // pred_check
          %p145 = pneg %p62
        $region30: #{tpu_custom_call.1} parent=23 // pred_check_branch
          %147 = sbr.rel (%p145) target = $region32
        $region31: #{tpu_custom_call.1} parent=23 // pred_region
          %149 = vsyncadd %s141, 0
          %s150 = smul.addr %s18, 8
          %s151 = scalar_lea.hbm %s1, %s150
          %s153 = sshll.u32 %s144, 4
          %s154 = int_to_ptr.vmem [resolvable:$true] %s153
          %s155 = sshll.u32 %s151, 4
          %s156 = int_to_ptr.hbm [resolvable:$true] %s155
          %158 = dma.vmem_to_hbm [thread:$0]  %s154, 128, %s156, %s141
        $region32: #{tpu_custom_call.1} parent=23 // pred_fallthru
          _
      $region24: #{tpu_custom_call.1} parent=5 // pred_fallthru
        _
      %p159 = scmp.le.s32.totalorder 2, %s13
      // Predicated region
      $region33: #{tpu_custom_call.1} parent=5 // pred_check
        %p160 = pneg %p159
      $region34: #{tpu_custom_call.1} parent=5 // pred_check_branch
        %162 = sbr.rel (%p160) target = $region36
      $region35: #{tpu_custom_call.1} parent=5 // pred_region
        %s163 = ssub.s32 %s13, 2
        // Predicated region
        $region37: #{tpu_custom_call.1} parent=35 // pred_check
          %p164 = pneg %p68
        $region38: #{tpu_custom_call.1} parent=35 // pred_check_branch
          %166 = sbr.rel (%p164) target = $region40
        $region39: #{tpu_custom_call.1} parent=35 // pred_region
          %s167 = sand.u32 %s53, 1
          %s168 = scalar_lea.sflag [#allocation4], %s167
          %s169 = sand.u32 %s53, 1
          %s170 = smul.addr %s169, 8
          %s171 = scalar_lea.vmem [#allocation5], %s170
          %173 = dma.done %s168, 128
        $region40: #{tpu_custom_call.1} parent=35 // pred_fallthru
          _
      $region36: #{tpu_custom_call.1} parent=5 // pred_fallthru
        _
    $region6: #{tpu_custom_call.1} parent=1 // loop_footer
      %s17 = sadd.s32 1, %s13
    $region7: #{tpu_custom_call.1} parent=1 // loop_footer_branch
      %12 = sbr.rel target = $region3
    $region8: #{tpu_custom_call.1} parent=1 // loop_exit
      _
    %174 = vsyncpa [#allocation3], 1
    %s175 = scalar_lea.sflag [#allocation3], 1
    %176 = vsyncpa %s175, 1
    %177 = vsyncpa [#allocation4], 1
    %s178 = scalar_lea.sflag [#allocation4], 1
    %179 = vsyncpa %s178, 1

</llo_original>
